<compile_context>
chip_gen: v7x
topology: tpu7x:2x2x1
jax: 0.10.0
libtpu: 0.0.40
codegen_flags: <defaults>
</compile_context>

<pallas_src>
import functools

import jax
import jax.numpy as jnp
from jax import lax
from jax.experimental import pallas as pl
from jax.experimental.pallas import tpu as pltpu


# TODO(synk): FairseqDecoder.forward is abstract (raises NotImplementedError);
# there is nothing to lower for it.  Only get_normalized_probs is implemented.
# TODO(synk): the adaptive_softmax branch depends on an external
# AdaptiveSoftmax module/targets that is not part of this base class's state;
# the standard (log_)softmax path is implemented instead.
# TODO(synk): vocab sizes that are not a multiple of 128 keep their tail vregs
# on masked stores; padding the vocabulary at the model level (not per call,
# which would cost a full extra HBM round trip) would make stores fully
# lane-dense.


# ------------------------------ kernels -------------------------------------


def _softmax_rows(x_ref, o_ref, log_probs):
    """Numerically-stable (log_)softmax along the last axis of one block."""
    x = x_ref[...].astype(jnp.float32)                 # `.float()` in reference
    x = x - jnp.max(x, axis=-1, keepdims=True)         # lane reduction (XLU)
    if log_probs:
        o_ref[...] = (x - jnp.log(jnp.sum(jnp.exp(x), axis=-1,
                                          keepdims=True))).astype(o_ref.dtype)
    else:
        e = jnp.exp(x)                                  # EUP
        denom = jnp.sum(e, axis=-1, keepdims=True)
        inv = pl.reciprocal(denom, approx=True)         # EUP slot (cheap)
        inv = inv * (2.0 - denom * inv)                 # Newton -> ~f32 exact
        o_ref[...] = (e * inv).astype(o_ref.dtype)


def _normalize_kernel(x_ref, o_ref, *, log_probs):
    _softmax_rows(x_ref, o_ref, log_probs)


def _normalize_pair_kernel(a_ref, b_ref, oa_ref, ob_ref, *, log_probs):
    # Two independent heads in one launch (two inputs, two outputs).
    _softmax_rows(a_ref, oa_ref, log_probs)
    _softmax_rows(b_ref, ob_ref, log_probs)


def _lse_stats_kernel(x_ref, lse_ref, m_sc, l_sc, *, vocab, chunk):
    """Online max / sum-exp over vocab chunks; emits per-row logsumexp."""
    j = pl.program_id(1)

    @pl.when(j == 0)
    def _():
        m_sc[...] = jnp.full_like(m_sc, -jnp.inf)
        l_sc[...] = jnp.zeros_like(l_sc)

    x = x_ref[...].astype(jnp.float32)
    # Mask columns of a partial last chunk (they contain padding/garbage).
    col = j * chunk + lax.broadcasted_iota(jnp.int32, x.shape, 1)
    x = jnp.where(col < vocab, x, -jnp.inf)

    m_new = jnp.maximum(m_sc[...], jnp.max(x, axis=-1, keepdims=True))
    l_sc[...] = (l_sc[...] * jnp.exp(m_sc[...] - m_new)
                 + jnp.sum(jnp.exp(x - m_new), axis=-1, keepdims=True))
    m_sc[...] = m_new

    @pl.when(j == pl.num_programs(1) - 1)
    def _():
        lse_ref[...] = m_sc[...] + jnp.log(l_sc[...])


def _apply_lse_kernel(x_ref, lse_ref, o_ref, *, log_probs):
    y = x_ref[...].astype(jnp.float32) - lse_ref[...]
    o_ref[...] = (y if log_probs else jnp.exp(y)).astype(o_ref.dtype)


# --------------------------- tiling heuristics -------------------------------


_DEFAULT_BUDGET = 24 << 20
_DEFAULT_VMEM_CAP = 48 << 20


def _vmem_budget_and_cap():
    """(per-step working-set byte budget, hard vmem_limit cap) per generation."""
    try:
        cap = pltpu.get_tpu_info().vmem_capacity_bytes
    except Exception:  # not on TPU / query unsupported -> conservative default
        return _DEFAULT_BUDGET, _DEFAULT_VMEM_CAP
    if cap >= (100 << 20):                       # v5e / v6e: 128 MiB VMEM
        return cap // 2, min(100 << 20, cap - (24 << 20))
    # v7x: 64 MiB per TensorCore -> keep real headroom for compiler scratch.
    budget = max(8 << 20, min(cap // 2, 32 << 20))
    limit = max(16 << 20, min(48 << 20, cap - (16 << 20)))
    return budget, limit


def _sublane_multiple(itemsize):
    # Sublane packing of the input DMA: f32 -> 8, bf16 -> 16, int8/fp8 -> 32.
    return {4: 8, 2: 16, 1: 32}.get(itemsize, 8)


def _per_row_bytes(vocab, in_itemsize, out_itemsize=4):
    # double-buffered input + double-buffered output + ~2 live f32 temporaries.
    return vocab * (2 * in_itemsize + 2 * out_itemsize + 2 * 4)


def _vmem_limit_bytes(per_step_bytes, cap_bytes):
    return int(min(cap_bytes, max(32 << 20, per_step_bytes + (8 << 20))))


def _choose_tile_rows(num_rows, per_row_bytes, sublane, budget_bytes,
                      max_rows=2048):
    """Largest sublane-multiple row tile whose working set fits the budget,
    capped so the grid has >= 2 steps when possible (v7x has 2 TensorCores)."""
    t = budget_bytes // per_row_bytes
    t = min(t, max_rows, pl.cdiv(num_rows, 2))
    return int(max(sublane, (t // sublane) * sublane))


def _choose_chunking(num_rows, per_elem_bytes, sublane, budget_bytes):
    """(tile_rows, vocab_chunk) for the vocab-chunked online-softmax path."""
    t = min(256, pl.cdiv(num_rows, 2))
    t = max(sublane, (t // sublane) * sublane)
    vc = budget_bytes // (t * per_elem_bytes)
    vc = max(128, (vc // 128) * 128)
    return int(t), int(vc)


def _rows(shape):
    r = 1
    for d in shape[:-1]:
        r *= d
    return r


# ------------------------------ wrappers -------------------------------------


def _pallas_normalized_probs(logits, log_probs, *, out_dtype=jnp.float32,
                             tile_rows=None, vocab_chunk=None):
    """(log_)softmax over the last dim of (..., vocab); float32 output by
    default (matches `.float()` + F.(log_)softmax in the reference)."""
    logits = jnp.asarray(logits)
    orig_shape = logits.shape
    V = orig_shape[-1]
    R = _rows(orig_shape)
    x = logits.reshape(R, V)                      # vocab on the lane axis

    in_item = jnp.dtype(x.dtype).itemsize
    out_item = jnp.dtype(out_dtype).itemsize
    sublane = _sublane_multiple(in_item)
    budget, cap = _vmem_budget_and_cap()
    per_elem = 2 * in_item + 2 * out_item + 2 * 4
    per_row = V * per_elem

    chunked = (vocab_chunk is not None) or (sublane * per_row > budget)

    if not chunked:
        if tile_rows is None:
            tile_rows = _choose_tile_rows(R, per_row, sublane, budget)
        else:
            tile_rows = max(sublane, (int(tile_rows) // sublane) * sublane)
        vmem_limit = _vmem_limit_bytes(tile_rows * per_row, cap)
        out = pl.pallas_call(
            functools.partial(_normalize_kernel, log_probs=log_probs),
            out_shape=jax.ShapeDtypeStruct((R, V), out_dtype),
            grid_spec=pltpu.PrefetchScalarGridSpec(
                num_scalar_prefetch=0,
                grid=(pl.cdiv(R, tile_rows),),
                in_specs=[pl.BlockSpec((tile_rows, V), lambda i: (i, 0))],
                out_specs=pl.BlockSpec((tile_rows, V), lambda i: (i, 0)),
            ),
            compiler_params=pltpu.CompilerParams(
                dimension_semantics=("parallel",),
                vmem_limit_bytes=vmem_limit,
            ),
        )(x)
        return out.reshape(orig_shape)

    # ---- vocab-chunked online-softmax path (very large vocabularies) -------
    auto_t, auto_vc = _choose_chunking(R, per_elem, sublane, budget)
    t_rows = auto_t if tile_rows is None else max(
        sublane, (int(tile_rows) // sublane) * sublane)
    vc = auto_vc if vocab_chunk is None else max(
        128, (int(vocab_chunk) // 128) * 128)
    vc = min(vc, pl.cdiv(V, 128) * 128)           # no wider than padded vocab
    n_chunks = pl.cdiv(V, vc)
    row_grid = pl.cdiv(R, t_rows)
    vmem_limit = _vmem_limit_bytes(t_rows * vc * per_elem, cap)

    # Pass 1: per-row logsumexp, running max/sum in VMEM scratch.
    lse = pl.pallas_call(
        functools.partial(_lse_stats_kernel, vocab=V, chunk=vc),
        out_shape=jax.ShapeDtypeStruct((R, 1), jnp.float32),
        grid_spec=pltpu.PrefetchScalarGridSpec(
            num_scalar_prefetch=0,
            grid=(row_grid, n_chunks),
            in_specs=[pl.BlockSpec((t_rows, vc), lambda i, j: (i, j))],
            out_specs=pl.BlockSpec((t_rows, 1), lambda i, j: (i, 0)),
            scratch_shapes=[pltpu.VMEM((t_rows, 1), jnp.float32),
                            pltpu.VMEM((t_rows, 1), jnp.float32)],
        ),
        compiler_params=pltpu.CompilerParams(
            dimension_semantics=("parallel", "arbitrary"),
            vmem_limit_bytes=vmem_limit,
        ),
    )(x)

    # Pass 2: elementwise finalize, lane-dense 128-multiple output chunks.
    out = pl.pallas_call(
        functools.partial(_apply_lse_kernel, log_probs=log_probs),
        out_shape=jax.ShapeDtypeStruct((R, V), out_dtype),
        grid_spec=pltpu.PrefetchScalarGridSpec(
            num_scalar_prefetch=0,
            grid=(row_grid, n_chunks),
            in_specs=[pl.BlockSpec((t_rows, vc), lambda i, j: (i, j)),
                      pl.BlockSpec((t_rows, 1), lambda i, j: (i, 0))],
            out_specs=pl.BlockSpec((t_rows, vc), lambda i, j: (i, j)),
        ),
        compiler_params=pltpu.CompilerParams(
            dimension_semantics=("parallel", "arbitrary"),
            vmem_limit_bytes=vmem_limit,
        ),
    )(x, lse)
    return out.reshape(orig_shape)


def _pallas_normalized_probs_pair(a, b, log_probs):
    """Both heads in ONE pallas_call (two in_specs / two out_specs): no
    concatenate copies, one launch, shared row grid.  Returns None if the two
    heads cannot share a row grid or would not fit VMEM fused."""
    Ra, Va = _rows(a.shape), a.shape[-1]
    Rb, Vb = _rows(b.shape), b.shape[-1]
    if Ra != Rb:
        return None
    ia = jnp.dtype(a.dtype).itemsize
    ib = jnp.dtype(b.dtype).itemsize
    sublane = max(_sublane_multiple(ia), _sublane_multiple(ib))
    budget, cap = _vmem_budget_and_cap()
    per_row = _per_row_bytes(Va, ia) + _per_row_bytes(Vb, ib)
    if sublane * per_row > budget:
        return None                              # too big to fuse
    tile = _choose_tile_rows(Ra, per_row, sublane, budget)
    vmem_limit = _vmem_limit_bytes(tile * per_row, cap)
    xa = a.reshape(Ra, Va)
    xb = b.reshape(Rb, Vb)
    oa, ob = pl.pallas_call(
        functools.partial(_normalize_pair_kernel, log_probs=log_probs),
        out_shape=(jax.ShapeDtypeStruct((Ra, Va), jnp.float32),
                   jax.ShapeDtypeStruct((Rb, Vb), jnp.float32)),
        grid_spec=pltpu.PrefetchScalarGridSpec(
            num_scalar_prefetch=0,
            grid=(pl.cdiv(Ra, tile),),
            in_specs=[pl.BlockSpec((tile, Va), lambda i: (i, 0)),
                      pl.BlockSpec((tile, Vb), lambda i: (i, 0))],
            out_specs=(pl.BlockSpec((tile, Va), lambda i: (i, 0)),
                       pl.BlockSpec((tile, Vb), lambda i: (i, 0))),
        ),
        compiler_params=pltpu.CompilerParams(
            dimension_semantics=("parallel",),
            vmem_limit_bytes=vmem_limit,
        ),
    )(xa, xb)
    return oa.reshape(a.shape), ob.reshape(b.shape)


# ------------------------------ module port ----------------------------------


class FairseqDecoderPallas:
    """JAX/Pallas port of fairseq's FairseqDecoder base class."""

    def __init__(self, dictionary=None):
        self.dictionary = dictionary
        self.adaptive_softmax = None          # base class defines none

    def forward(self, encoder_out, prev_output_tokens=None,
                prev_output_sen_piece_tokens=None):
        raise NotImplementedError

    def get_normalized_probs(self, net_output, log_probs, sample=None):
        """net_output: (logits, logits_sen_piece); each (B, T, V) or None."""
        a, b = net_output[0], net_output[1]
        assert (a is not None) or (b is not None)

        if a is not None and b is not None:
            a = jnp.asarray(a)
            b = jnp.asarray(b)
            fused = _pallas_normalized_probs_pair(a, b, log_probs)
            if fused is not None:
                return fused

        out = _pallas_normalized_probs(a, log_probs) if a is not None else None
        out_sp = _pallas_normalized_probs(b, log_probs) if b is not None else None
        return (out, out_sp)

    def max_positions(self):
        return 1e6

    def upgrade_state_dict(self, state_dict):
        return state_dict


if __name__ == "__main__":
    key = jax.random.PRNGKey(0)
    k1, k2, k3, k4, k5 = jax.random.split(key, 5)

    decoder = FairseqDecoderPallas(dictionary=None)

    # 1) Two heads, different vocab sizes -> fused two-in/two-out launch.
    logits = jax.random.normal(k1, (2, 8, 32), dtype=jnp.float32)
    logits_sp = jax.random.normal(k2, (2, 8, 64), dtype=jnp.float32)
    lp, lp_sp = decoder.get_normalized_probs((logits, logits_sp), log_probs=True)
    p, p_sp = decoder.get_normalized_probs((logits, logits_sp), log_probs=False)
    jax.block_until_ready((lp, lp_sp, p, p_sp))
    assert jnp.allclose(lp, jax.nn.log_softmax(logits, axis=-1), atol=1e-5)
    assert jnp.allclose(lp_sp, jax.nn.log_softmax(logits_sp, axis=-1), atol=1e-5)
    assert jnp.allclose(p, jax.nn.softmax(logits, axis=-1), atol=2e-5)
    assert jnp.allclose(p_sp, jax.nn.softmax(logits_sp, axis=-1), atol=2e-5)

    # 2) bf16 logits fed directly (half the input HBM traffic); the reference
    #    casts to f32 first, matching `.float()` in PyTorch.  Single head.
    logits_bf16 = jax.random.normal(
        k3, (2, 8, 128), dtype=jnp.float32).astype(jnp.bfloat16)
    lp_bf, none_out = decoder.get_normalized_probs((logits_bf16, None),
                                                   log_probs=True)
    jax.block_until_ready(lp_bf)
    assert none_out is None
    assert lp_bf.dtype == jnp.float32
    ref_bf = jax.nn.log_softmax(logits_bf16.astype(jnp.float32), axis=-1)
    assert jnp.allclose(lp_bf, ref_bf, atol=1e-5)

    # 3) Only the sentence-piece head present.
    none_a, p_only = decoder.get_normalized_probs((None, logits_sp),
                                                  log_probs=False)
    jax.block_until_ready(p_only)
    assert none_a is None
    assert jnp.allclose(p_only, jax.nn.softmax(logits_sp, axis=-1), atol=2e-5)

    # 4) Non-multiple row count with the default (byte-budgeted) tile ->
    #    partial last row block; padded rows are computed but discarded.
    c = jax.random.normal(k4, (4, 50, 128), dtype=jnp.float32)   # R = 200
    pc = _pallas_normalized_probs(c, log_probs=False)
    jax.block_until_ready(pc)
    assert jnp.allclose(pc, jax.nn.softmax(c, axis=-1), atol=2e-5)

    # 5) Vocab-chunked online-softmax path (forced small chunk to exercise the
    #    large-vocab code path, incl. a partial, masked last vocab chunk).
    d = jax.random.normal(k5, (2, 12, 200), dtype=jnp.float32)
    for lg in (True, False):
        got = _pallas_normalized_probs(d, log_probs=lg, tile_rows=8,
                                       vocab_chunk=128)
        jax.block_until_ready(got)
        ref = (jax.nn.log_softmax if lg else jax.nn.softmax)(d, axis=-1)
        assert jnp.allclose(got, ref, atol=2e-5)

    print("KERNEL_OK")
</pallas_src>

<mosaic_0001>
module attributes {stable_mosaic.version = 11 : i64} {
  func.func @_normalize_pair_kernel(%arg0: i32, %arg1: memref<8x32xf32, #tpu.memory_space<vmem>>, %arg2: memref<8x64xf32, #tpu.memory_space<vmem>>, %arg3: memref<8x32xf32, #tpu.memory_space<vmem>>, %arg4: memref<8x64xf32, #tpu.memory_space<vmem>>) attributes {dimension_semantics = [#tpu.dimension_semantics<parallel>], iteration_bounds = array<i64: 2>, scalar_prefetch = 0 : i64, scratch_operands = 0 : i64, tpu.core_type = #tpu.core_type<tc>, window_params = [{transform_indices = @transform_0, window_bounds = array<i64: 8, 32>}, {transform_indices = @transform_1, window_bounds = array<i64: 8, 64>}, {transform_indices = @transform_2, window_bounds = array<i64: 8, 32>}, {transform_indices = @transform_3, window_bounds = array<i64: 8, 64>}]} {
    %c0 = arith.constant 0 : index
    %c0_0 = arith.constant 0 : index
    %0 = vector.load %arg1[%c0, %c0_0] : memref<8x32xf32, #tpu.memory_space<vmem>>, vector<8x32xf32>
    %cst = arith.constant dense<0xFF800000> : vector<8xf32>
    %1 = vector.multi_reduction <maximumf>, %0, %cst [1] : vector<8x32xf32> to vector<8xf32>
    %2 = vector.shape_cast %1 : vector<8xf32> to vector<8x1xf32>
    %3 = vector.broadcast %2 : vector<8x1xf32> to vector<8x32xf32>
    %4 = arith.subf %0, %3 : vector<8x32xf32>
    %5 = math.exp %4 : vector<8x32xf32>
    %cst_1 = arith.constant dense<0.000000e+00> : vector<8xf32>
    %6 = vector.multi_reduction <add>, %5, %cst_1 [1] : vector<8x32xf32> to vector<8xf32>
    %7 = vector.shape_cast %6 : vector<8xf32> to vector<8x1xf32>
    %8 = math.log %7 : vector<8x1xf32>
    %9 = vector.broadcast %8 : vector<8x1xf32> to vector<8x32xf32>
    %10 = arith.subf %4, %9 : vector<8x32xf32>
    %c0_2 = arith.constant 0 : index
    %c0_3 = arith.constant 0 : index
    %11 = vector.load %arg3[%c0_2, %c0_3] : memref<8x32xf32, #tpu.memory_space<vmem>>, vector<8x32xf32>
    tpu.vector_store %arg3[%c0_2, %c0_3], %10 {strides = array<i32>} : memref<8x32xf32, #tpu.memory_space<vmem>>, vector<8x32xf32>,
    %c0_4 = arith.constant 0 : index
    %c0_5 = arith.constant 0 : index
    %12 = vector.load %arg2[%c0_4, %c0_5] : memref<8x64xf32, #tpu.memory_space<vmem>>, vector<8x64xf32>
    %cst_6 = arith.constant dense<0xFF800000> : vector<8xf32>
    %13 = vector.multi_reduction <maximumf>, %12, %cst_6 [1] : vector<8x64xf32> to vector<8xf32>
    %14 = vector.shape_cast %13 : vector<8xf32> to vector<8x1xf32>
    %15 = vector.broadcast %14 : vector<8x1xf32> to vector<8x64xf32>
    %16 = arith.subf %12, %15 : vector<8x64xf32>
    %17 = math.exp %16 : vector<8x64xf32>
    %cst_7 = arith.constant dense<0.000000e+00> : vector<8xf32>
    %18 = vector.multi_reduction <add>, %17, %cst_7 [1] : vector<8x64xf32> to vector<8xf32>
    %19 = vector.shape_cast %18 : vector<8xf32> to vector<8x1xf32>
    %20 = math.log %19 : vector<8x1xf32>
    %21 = vector.broadcast %20 : vector<8x1xf32> to vector<8x64xf32>
    %22 = arith.subf %16, %21 : vector<8x64xf32>
    %c0_8 = arith.constant 0 : index
    %c0_9 = arith.constant 0 : index
    %23 = vector.load %arg4[%c0_8, %c0_9] : memref<8x64xf32, #tpu.memory_space<vmem>>, vector<8x64xf32>
    tpu.vector_store %arg4[%c0_8, %c0_9], %22 {strides = array<i32>} : memref<8x64xf32, #tpu.memory_space<vmem>>, vector<8x64xf32>,
    return
  }
  func.func @transform_0(%arg0: i32) -> (i32, i32) {
    %c0_i32 = arith.constant 0 : i32
    %c0_i32_0 = arith.constant 0 : i32
    return %arg0, %c0_i32 : i32, i32
  }
  func.func @transform_1(%arg0: i32) -> (i32, i32) {
    %c0_i32 = arith.constant 0 : i32
    %c0_i32_0 = arith.constant 0 : i32
    return %arg0, %c0_i32 : i32, i32
  }
  func.func @transform_2(%arg0: i32) -> (i32, i32) {
    %c0_i32 = arith.constant 0 : i32
    %c0_i32_0 = arith.constant 0 : i32
    return %arg0, %c0_i32 : i32, i32
  }
  func.func @transform_3(%arg0: i32) -> (i32, i32) {
    %c0_i32 = arith.constant 0 : i32
    %c0_i32_0 = arith.constant 0 : i32
    return %arg0, %c0_i32 : i32, i32
  }
}

</mosaic_0001>

<llo_original>
// kernel: tpu_custom_call.1
$region0: #{tpu_custom_call.1}
  #allocation0 [shape = 'u32[]', space=smem, size = 0x4, offset = 0x4, fixed_abs, tag = 'smem constant byte address 0x4 - core index']
  #allocation1 [shape = 'u32[144,128]{1,0:T(1,128)}', space=vmem, size = 0x12000, scoped, tag = 'internal scratch']
  %s0 = inlined_call_operand.hbm [shape: f32[16,32], index: 0, kind: input, shape index: {}]
  %s1 = inlined_call_operand.hbm [shape: f32[16,64], index: 1, kind: input, shape index: {}]
  %s2 = inlined_call_operand.hbm [shape: f32[16,32], index: 2, kind: output, shape index: {0}]
  %s3 = inlined_call_operand.hbm [shape: f32[16,64], index: 3, kind: output, shape index: {1}]
  %4 = xla_tuple %s2, %s3
  %s5 = sld [smem:[#allocation0]]
  $region57: #{tpu_custom_call.1} parent=0
    _
  %s7 = ssub.s32 1, %s5
  %s8 = scalar_select 0, %s7, %s5
  $region1: #{tpu_custom_call.1} parent=0
    #allocation2 [shape = 'u8[8192]{0}', space=vmem, size = 0x2000, scoped, tag = 'input window, operand 0']
    #allocation3 [shape = 's32[2]{0}', space=sflag, size = 0x8, scoped, tag = 'scoped memory for tpu_custom_call.1']
    #allocation4 [shape = 's32[2]{0}', space=sflag, size = 0x8, scoped, tag = 'scoped memory for tpu_custom_call.1']
    #allocation5 [shape = 'u8[8192]{0}', space=vmem, size = 0x2000, scoped, tag = 'input window, operand 1']
    #allocation6 [shape = 's32[2]{0}', space=sflag, size = 0x8, scoped, tag = 'scoped memory for tpu_custom_call.1']
    #allocation7 [shape = 'u8[8192]{0}', space=vmem, size = 0x2000, scoped, tag = 'output window, operand 0']
    #allocation8 [shape = 'u8[8192]{0}', space=vmem, size = 0x2000, scoped, tag = 'output window, operand 1']
    #allocation9 [shape = 's32[2]{0}', space=sflag, size = 0x8, scoped, tag = 'scoped memory for tpu_custom_call.1']
    %9 = vsyncpa [#allocation3], 0
    %s10 = scalar_lea.sflag [#allocation3], 1
    %11 = vsyncpa %s10, 0
    %12 = vsyncpa [#allocation6], 0
    %s13 = scalar_lea.sflag [#allocation6], 1
    %14 = vsyncpa %s13, 0
    %15 = vsyncpa [#allocation4], 0
    %s16 = scalar_lea.sflag [#allocation4], 1
    %17 = vsyncpa %s16, 0
    %18 = vsyncpa [#allocation9], 0
    %s19 = scalar_lea.sflag [#allocation9], 1
    %20 = vsyncpa %s19, 0
    loop: start=0, step=1, limit=4
    $region2: #{tpu_custom_call.1} parent=1 // loop_pre_header
      _
    $region3: #{tpu_custom_call.1} parent=1 // loop_header
      %s22 = sphi 0, %s26
      %p23 = scmp.ge.s32.totalorder %s22, 4
      %s32 = sphi 0, %s34
      %s35 = sphi 0, %s32
      %s36 = sphi 0, %s35
      %s52 = sphi 0, %s36
      %s58 = sphi 0, %s60
      %s61 = sphi 0, %s58
      %s62 = sphi 0, %s61
      %s78 = sphi 0, %s62
      %s84 = sphi 0, %s86
      %s87 = sphi 0, %s84
      %s88 = sphi 0, %s87
      %s104 = sphi 0, %s88
      %s110 = sphi 0, %s112
      %s113 = sphi 0, %s110
      %s114 = sphi 0, %s113
      %s130 = sphi 0, %s114
    $region4: #{tpu_custom_call.1} parent=1 // loop_header_branch
      %25 = sbr.rel (%p23) target = $region8
    $region5: #{tpu_custom_call.1} parent=1 // loop_body
      %s27 = ssub.s32 %s22, 1
      %s28 = ssub.s32 %s22, 2
      %s29 = sadd.s32 %s22, 1
      %s30 = ssub.s32 %s22, %s29
      %p31 = scmp.eq.s32.totalorder %s30, 0
      %s33 = sadd.s32 %s32, 1
      %s34 = scalar_select %p31, %s32, %s33
      %p37 = pneg %p31
      %p38 = scmp.eq.s32.totalorder %s22, 1
      %p39 = por %p37, %p38
      %p40 = scmp.ne.s32.totalorder %s32, %s35
      %p41 = scmp.eq.s32.totalorder %s22, 0
      %p42 = por %p40, %p41
      %p43 = scmp.ne.s32.totalorder %s32, %s35
      %p44 = scmp.eq.s32.totalorder %s27, 1
      %p45 = por %p43, %p44
      %p46 = scmp.ne.s32.totalorder %s35, %s36
      %p47 = scmp.eq.s32.totalorder %s27, 0
      %p48 = por %p46, %p47
      %p49 = scmp.ne.s32.totalorder %s35, %s36
      %p50 = scmp.eq.s32.totalorder %s28, 1
      %p51 = por %p49, %p50
      %p53 = scmp.ne.s32.totalorder %s36, %s52
      %p54 = scmp.eq.s32.totalorder %s28, 0
      %p55 = por %p53, %p54
      %s56 = ssub.s32 %s22, %s29
      %p57 = scmp.eq.s32.totalorder %s56, 0
      %s59 = sadd.s32 %s58, 1
      %s60 = scalar_select %p57, %s58, %s59
      %p63 = pneg %p57
      %p64 = scmp.eq.s32.totalorder %s22, 1
      %p65 = por %p63, %p64
      %p66 = scmp.ne.s32.totalorder %s58, %s61
      %p67 = scmp.eq.s32.totalorder %s22, 0
      %p68 = por %p66, %p67
      %p69 = scmp.ne.s32.totalorder %s58, %s61
      %p70 = scmp.eq.s32.totalorder %s27, 1
      %p71 = por %p69, %p70
      %p72 = scmp.ne.s32.totalorder %s61, %s62
      %p73 = scmp.eq.s32.totalorder %s27, 0
      %p74 = por %p72, %p73
      %p75 = scmp.ne.s32.totalorder %s61, %s62
      %p76 = scmp.eq.s32.totalorder %s28, 1
      %p77 = por %p75, %p76
      %p79 = scmp.ne.s32.totalorder %s62, %s78
      %p80 = scmp.eq.s32.totalorder %s28, 0
      %p81 = por %p79, %p80
      %s82 = ssub.s32 %s22, %s29
      %p83 = scmp.eq.s32.totalorder %s82, 0
      %s85 = sadd.s32 %s84, 1
      %s86 = scalar_select %p83, %s84, %s85
      %p89 = pneg %p83
      %p90 = scmp.eq.s32.totalorder %s22, 1
      %p91 = por %p89, %p90
      %p92 = scmp.ne.s32.totalorder %s84, %s87
      %p93 = scmp.eq.s32.totalorder %s22, 0
      %p94 = por %p92, %p93
      %p95 = scmp.ne.s32.totalorder %s84, %s87
      %p96 = scmp.eq.s32.totalorder %s27, 1
      %p97 = por %p95, %p96
      %p98 = scmp.ne.s32.totalorder %s87, %s88
      %p99 = scmp.eq.s32.totalorder %s27, 0
      %p100 = por %p98, %p99
      %p101 = scmp.ne.s32.totalorder %s87, %s88
      %p102 = scmp.eq.s32.totalorder %s28, 1
      %p103 = por %p101, %p102
      %p105 = scmp.ne.s32.totalorder %s88, %s104
      %p106 = scmp.eq.s32.totalorder %s28, 0
      %p107 = por %p105, %p106
      %s108 = ssub.s32 %s22, %s29
      %p109 = scmp.eq.s32.totalorder %s108, 0
      %s111 = sadd.s32 %s110, 1
      %s112 = scalar_select %p109, %s110, %s111
      %p115 = pneg %p109
      %p116 = scmp.eq.s32.totalorder %s22, 1
      %p117 = por %p115, %p116
      %p118 = scmp.ne.s32.totalorder %s110, %s113
      %p119 = scmp.eq.s32.totalorder %s22, 0
      %p120 = por %p118, %p119
      %p121 = scmp.ne.s32.totalorder %s110, %s113
      %p122 = scmp.eq.s32.totalorder %s27, 1
      %p123 = por %p121, %p122
      %p124 = scmp.ne.s32.totalorder %s113, %s114
      %p125 = scmp.eq.s32.totalorder %s27, 0
      %p126 = por %p124, %p125
      %p127 = scmp.ne.s32.totalorder %s113, %s114
      %p128 = scmp.eq.s32.totalorder %s28, 1
      %p129 = por %p127, %p128
      %p131 = scmp.ne.s32.totalorder %s114, %s130
      %p132 = scmp.eq.s32.totalorder %s28, 0
      %p133 = por %p131, %p132
      %p134 = scmp.le.s32.totalorder 1, %s22
      %p135 = scmp.lt.s32.totalorder %s22, 3
      %p136 = pnand %p134, %p135
      %p137 = pneg %p136
      // Predicated region
      $region9: #{tpu_custom_call.1} parent=5 // pred_check
        _
      $region10: #{tpu_custom_call.1} parent=5 // pred_check_branch
        %139 = sbr.rel (%p136) target = $region12
      $region11: #{tpu_custom_call.1} parent=5 // pred_region
        %s140 = ssub.s32 %s22, 1
      $region12: #{tpu_custom_call.1} parent=5 // pred_fallthru
        _
      %p141 = scmp.lt.s32.totalorder %s22, 2
      // Predicated region
      $region13: #{tpu_custom_call.1} parent=5 // pred_check
        %p142 = pneg %p141
      $region14: #{tpu_custom_call.1} parent=5 // pred_check_branch
        %144 = sbr.rel (%p142) target = $region16
      $region15: #{tpu_custom_call.1} parent=5 // pred_region
        // Predicated region
        $region17: #{tpu_custom_call.1} parent=15 // pred_check
          %p145 = pneg %p42
        $region18: #{tpu_custom_call.1} parent=15 // pred_check_branch
          %147 = sbr.rel (%p145) target = $region20
        $region19: #{tpu_custom_call.1} parent=15 // pred_region
          %s148 = sand.u32 %s32, 1
          %s149 = scalar_lea.sflag [#allocation3], %s148
          %s150 = sand.u32 %s32, 1
          %s151 = smul.addr %s150, 8
          %s152 = scalar_lea.vmem [#allocation2], %s151
          %s154 = ssub.s32 128, 128
          %155 = vsyncadd %s149, %s154
          %s156 = smul.addr %s22, 128
          %s157 = scalar_lea.hbm %s0, %s156
          %s159 = sshll.u32 %s152, 4
          %s160 = int_to_ptr.vmem [resolvable:$true] %s159
          %162 = dma.hbm_to_vmem [thread:$0]  %s157, 128, %s160, %s149
        $region20: #{tpu_custom_call.1} parent=15 // pred_fallthru
          _
        // Predicated region
        $region21: #{tpu_custom_call.1} parent=15 // pred_check
          %p163 = pneg %p68
        $region22: #{tpu_custom_call.1} parent=15 // pred_check_branch
          %165 = sbr.rel (%p163) target = $region24
        $region23: #{tpu_custom_call.1} parent=15 // pred_region
          %s166 = sand.u32 %s58, 1
          %s167 = scalar_lea.sflag [#allocation6], %s166
          %s168 = sand.u32 %s58, 1
          %s169 = smul.addr %s168, 8
          %s170 = scalar_lea.vmem [#allocation5], %s169
          %s172 = ssub.s32 128, 128
          %173 = vsyncadd %s167, %s172
          %s174 = smul.addr %s22, 128
          %s175 = scalar_lea.hbm %s1, %s174
          %s177 = sshll.u32 %s170, 4
          %s178 = int_to_ptr.vmem [resolvable:$true] %s177
          %180 = dma.hbm_to_vmem [thread:$0]  %s175, 128, %s178, %s167
        $region24: #{tpu_custom_call.1} parent=15 // pred_fallthru
          _
      $region16: #{tpu_custom_call.1} parent=5 // pred_fallthru
        _
      %p181 = scmp.le.s32.totalorder 1, %s22
      %p182 = scmp.lt.s32.totalorder %s22, 3
      %p183 = pnand %p181, %p182
      %p184 = pneg %p183
      // Predicated region
      $region25: #{tpu_custom_call.1} parent=5 // pred_check
        _
      $region26: #{tpu_custom_call.1} parent=5 // pred_check_branch
        %186 = sbr.rel (%p183) target = $region28
      $region27: #{tpu_custom_call.1} parent=5 // pred_region
        %s187 = ssub.s32 %s22, 1
        %s188 = sand.u32 %s35, 1
        %s189 = scalar_lea.sflag [#allocation3], %s188
        %s190 = sand.u32 %s35, 1
        %s191 = smul.addr %s190, 8
        %s192 = scalar_lea.vmem [#allocation2], %s191
        // Predicated region
        $region29: #{tpu_custom_call.1} parent=27 // pred_check
          %p193 = pneg %p48
        $region30: #{tpu_custom_call.1} parent=27 // pred_check_branch
          %195 = sbr.rel (%p193) target = $region32
        $region31: #{tpu_custom_call.1} parent=27 // pred_region
          %196 = dma.done %s189, 128
        $region32: #{tpu_custom_call.1} parent=27 // pred_fallthru
          _
        %s197 = sand.u32 %s61, 1
        %s198 = scalar_lea.sflag [#allocation6], %s197
        %s199 = sand.u32 %s61, 1
        %s200 = smul.addr %s199, 8
        %s201 = scalar_lea.vmem [#allocation5], %s200
        // Predicated region
        $region33: #{tpu_custom_call.1} parent=27 // pred_check
          %p202 = pneg %p74
        $region34: #{tpu_custom_call.1} parent=27 // pred_check_branch
          %204 = sbr.rel (%p202) target = $region36
        $region35: #{tpu_custom_call.1} parent=27 // pred_region
          %205 = dma.done %s198, 128
        $region36: #{tpu_custom_call.1} parent=27 // pred_fallthru
          _
        %s206 = sand.u32 %s35, 1
        %s207 = scalar_lea.sflag [#allocation3], %s206
        %s208 = sand.u32 %s35, 1
        %s209 = smul.addr %s208, 8
        %s210 = scalar_lea.vmem [#allocation2], %s209
        %p211 = pneg %p48
        %p212 = pneg %p45
        %s213 = sand.u32 %s61, 1
        %s214 = scalar_lea.sflag [#allocation6], %s213
        %s215 = sand.u32 %s61, 1
        %s216 = smul.addr %s215, 8
        %s217 = scalar_lea.vmem [#allocation5], %s216
        %p218 = pneg %p74
        %p219 = pneg %p71
        %p220 = pneg %p100
        %p221 = pneg %p97
        %s222 = sand.u32 %s87, 1
        %s223 = scalar_lea.sflag [#allocation4], %s222
        %s224 = sand.u32 %s87, 1
        %s225 = smul.addr %s224, 8
        %s226 = scalar_lea.vmem [#allocation7], %s225
        %p227 = pneg %p126
        %p228 = pneg %p123
        %s229 = sand.u32 %s113, 1
        %s230 = scalar_lea.sflag [#allocation9], %s229
        %s231 = sand.u32 %s113, 1
        %s232 = smul.addr %s231, 8
        %s233 = scalar_lea.vmem [#allocation8], %s232
        %v234 = vld [vmem:[%s192] sm:$0xff]
        %vm235 = vcmask 261120
        %v236 = vsel %vm235, %v234, -inf
        %237 = vmax.xlane.f32.xlu0 %v236
        %v238 = vpop.xlane.xlu0 %237
        %v239 = vsub.f32 %v234, %v238
        %v240 = vmul.f32 %v239, 1.442695
        %v241 = vpow.pop %v240
        %v242 = vsel %vm235, %v241, 0.0
        %243 = vadd.xlane.f32.xlu0 %v242
        %v244 = vpop.xlane.xlu0 %243
        %v245 = vlog2.pop %v244
        %v246 = vmul.f32 %v245, 0.6931472
        %v247 = vsub.f32 %v239, %v246
        %248 = vst.msk [vmem:[%s226] sm:$0xff] %vm235, %v247
        %v249 = vld [vmem:[%s201] sm:$0xff]
        %vm250 = vcmask 523264
        %v251 = vsel %vm250, %v249, -inf
        %252 = vmax.xlane.f32.xlu0 %v251
        %v253 = vpop.xlane.xlu0 %252
        %v254 = vsub.f32 %v249, %v253
        %v255 = vmul.f32 %v254, 1.442695
        %v256 = vpow.pop %v255
        %v257 = vsel %vm250, %v256, 0.0
        %258 = vadd.xlane.f32.xlu0 %v257
        %v259 = vpop.xlane.xlu0 %258
        %v260 = vlog2.pop %v259
        %v261 = vmul.f32 %v260, 0.6931472
        %v262 = vsub.f32 %v254, %v261
        %263 = vst.msk [vmem:[%s233] sm:$0xff] %vm250, %v262
        %s264 = sand.u32 %s87, 1
        %s265 = scalar_lea.sflag [#allocation4], %s264
        %s266 = sand.u32 %s87, 1
        %s267 = smul.addr %s266, 8
        %s268 = scalar_lea.vmem [#allocation7], %s267
        %s269 = sand.u32 %s113, 1
        %s270 = scalar_lea.sflag [#allocation9], %s269
        %s271 = sand.u32 %s113, 1
        %s272 = smul.addr %s271, 8
        %s273 = scalar_lea.vmem [#allocation8], %s272
        // Predicated region
        $region37: #{tpu_custom_call.1} parent=27 // pred_check
          %p274 = pneg %p97
        $region38: #{tpu_custom_call.1} parent=27 // pred_check_branch
          %276 = sbr.rel (%p274) target = $region40
        $region39: #{tpu_custom_call.1} parent=27 // pred_region
          %s278 = ssub.s32 128, 128
          %279 = vsyncadd %s265, %s278
          %s280 = smul.addr %s27, 128
          %s281 = scalar_lea.hbm %s2, %s280
          %s283 = sshll.u32 %s268, 4
          %s284 = int_to_ptr.vmem [resolvable:$true] %s283
          %286 = dma.vmem_to_hbm [thread:$0]  %s284, 128, %s281, %s265
        $region40: #{tpu_custom_call.1} parent=27 // pred_fallthru
          _
        // Predicated region
        $region41: #{tpu_custom_call.1} parent=27 // pred_check
          %p287 = pneg %p123
        $region42: #{tpu_custom_call.1} parent=27 // pred_check_branch
          %289 = sbr.rel (%p287) target = $region44
        $region43: #{tpu_custom_call.1} parent=27 // pred_region
          %s291 = ssub.s32 128, 128
          %292 = vsyncadd %s270, %s291
          %s293 = smul.addr %s27, 128
          %s294 = scalar_lea.hbm %s3, %s293
          %s296 = sshll.u32 %s273, 4
          %s297 = int_to_ptr.vmem [resolvable:$true] %s296
          %299 = dma.vmem_to_hbm [thread:$0]  %s297, 128, %s294, %s270
        $region44: #{tpu_custom_call.1} parent=27 // pred_fallthru
          _
      $region28: #{tpu_custom_call.1} parent=5 // pred_fallthru
        _
      %p300 = scmp.le.s32.totalorder 2, %s22
      // Predicated region
      $region45: #{tpu_custom_call.1} parent=5 // pred_check
        %p301 = pneg %p300
      $region46: #{tpu_custom_call.1} parent=5 // pred_check_branch
        %303 = sbr.rel (%p301) target = $region48
      $region47: #{tpu_custom_call.1} parent=5 // pred_region
        %s304 = ssub.s32 %s22, 2
        // Predicated region
        $region49: #{tpu_custom_call.1} parent=47 // pred_check
          %p305 = pneg %p103
        $region50: #{tpu_custom_call.1} parent=47 // pred_check_branch
          %307 = sbr.rel (%p305) target = $region52
        $region51: #{tpu_custom_call.1} parent=47 // pred_region
          %s308 = sand.u32 %s88, 1
          %s309 = scalar_lea.sflag [#allocation4], %s308
          %s310 = sand.u32 %s88, 1
          %s311 = smul.addr %s310, 8
          %s312 = scalar_lea.vmem [#allocation7], %s311
          %313 = dma.done %s309, 128
        $region52: #{tpu_custom_call.1} parent=47 // pred_fallthru
          _
        // Predicated region
        $region53: #{tpu_custom_call.1} parent=47 // pred_check
          %p314 = pneg %p129
        $region54: #{tpu_custom_call.1} parent=47 // pred_check_branch
          %316 = sbr.rel (%p314) target = $region56
        $region55: #{tpu_custom_call.1} parent=47 // pred_region
          %s317 = sand.u32 %s114, 1
          %s318 = scalar_lea.sflag [#allocation9], %s317
          %s319 = sand.u32 %s114, 1
          %s320 = smul.addr %s319, 8
          %s321 = scalar_lea.vmem [#allocation8], %s320
          %322 = dma.done %s318, 128
        $region56: #{tpu_custom_call.1} parent=47 // pred_fallthru
          _
      $region48: #{tpu_custom_call.1} parent=5 // pred_fallthru
        _
    $region6: #{tpu_custom_call.1} parent=1 // loop_footer
      %s26 = sadd.s32 1, %s22
    $region7: #{tpu_custom_call.1} parent=1 // loop_footer_branch
      %21 = sbr.rel target = $region3
    $region8: #{tpu_custom_call.1} parent=1 // loop_exit
      _
    %323 = vsyncpa [#allocation3], 1
    %s324 = scalar_lea.sflag [#allocation3], 1
    %325 = vsyncpa %s324, 1
    %326 = vsyncpa [#allocation6], 1
    %s327 = scalar_lea.sflag [#allocation6], 1
    %328 = vsyncpa %s327, 1
    %329 = vsyncpa [#allocation4], 1
    %s330 = scalar_lea.sflag [#allocation4], 1
    %331 = vsyncpa %s330, 1
    %332 = vsyncpa [#allocation9], 1
    %s333 = scalar_lea.sflag [#allocation9], 1
    %334 = vsyncpa %s333, 1

</llo_original>
